<compile_context>
chip_gen: v7x
topology: tpu7x:2x2x1
jax: 0.10.0
libtpu: 0.0.40
codegen_flags: <defaults>
</compile_context>

<pallas_src>
import functools

import jax
import jax.numpy as jnp
from jax import lax
from jax.experimental import pallas as pl
from jax.experimental.pallas import tpu as pltpu

_EPS = 1e-12            # F.normalize default eps
_EPS_SQ = _EPS * _EPS   # clamp on squared norms (sqrt-free form)


def _mal_kernel(grad_ref, tgt_ref, out_ref, acc_ref, *,
                inv_hw, total_rows, ragged):
    # grad_ref: (1, rows, HW)  rows = channel-chunk * 4 (channel-major, frame-minor)
    # tgt_ref : (1, 4, HW)
    # out_ref : (1, 1, 128)    lanes 0/1/2 = sim_spa_temp / sim_tempo / sim_spa
    # acc_ref : (4, HW) f32    running sum over channels of weight * gradient
    c_idx = pl.program_id(1)
    n_c = pl.num_programs(1)
    rows = grad_ref.shape[1]

    @pl.when(c_idx == 0)
    def _():
        acc_ref[...] = jnp.zeros_like(acc_ref)

    # Frame selector sel[t, r] = 1 iff row r belongs to frame t (r % 4 == t).
    # Every chunk is a multiple of 4 rows, so the local r % 4 is the global frame.
    r_iota = lax.broadcasted_iota(jnp.int32, (4, rows), 1)
    t_iota = lax.broadcasted_iota(jnp.int32, (4, rows), 0)
    sel = (r_iota % 4 == t_iota).astype(jnp.float32)            # (4, rows)

    def accumulate(g_blk):
        # AdaptiveAvgPool3d((4,1,1)) with T==4: mean over H*W per (channel, frame).
        weight = jnp.sum(g_blk.astype(jnp.float32), axis=-1,
                         keepdims=True) * inv_hw                 # (rows, 1)
        # Fold the pooling weight into the tiny selector (no (rows, HW) temp).
        sel_w = sel * jnp.transpose(weight)                      # (4, rows) f32
        lhs = sel_w if g_blk.dtype == jnp.float32 else sel_w.astype(g_blk.dtype)
        # Weighted per-frame sum on the MXU, f32 accumulate, native-dtype RHS.
        acc_ref[...] += jnp.dot(lhs, g_blk,
                                preferred_element_type=jnp.float32)  # (4, HW)

    g = grad_ref[0]                                              # (rows, HW), native dtype
    if ragged:
        # Only the final channel chunk can contain out-of-bounds rows; mask the
        # gradient rows there (values of OOB block elements are unspecified).
        @pl.when(c_idx < n_c - 1)
        def _():
            accumulate(g)

        @pl.when(c_idx == n_c - 1)
        def _():
            ridx = lax.broadcasted_iota(jnp.int32, g.shape, 0) + c_idx * rows
            accumulate(jnp.where(ridx < total_rows, g, jnp.zeros_like(g)))
    else:
        accumulate(g)

    # ---- epilogue: once per batch element, after the channel reduction ----
    @pl.when(c_idx == n_c - 1)
    def _():
        predict = jnp.maximum(acc_ref[...], 0.0)                 # relu, (4, HW)
        t = tgt_ref[0].astype(jnp.float32)                       # (4, HW)

        def inv_l2(sq):
            # 1 / max(||x||, eps) == rsqrt(max(||x||^2, eps^2))  (EUP op)
            return lax.rsqrt(jnp.maximum(sq, _EPS_SQ))

        # ---- forward_spatial_temporal ----
        target_score = jnp.sum(t, axis=-1, keepdims=True)        # (4, 1)
        m = jnp.max(target_score, axis=0, keepdims=True)         # (1, 1)
        e = jnp.exp(target_score - m)                            # no padded frames
        target_att = e / jnp.sum(e, axis=0, keepdims=True)       # softmax over frames

        p_sq = jnp.sum(predict * predict, axis=-1, keepdims=True)
        t_sq = jnp.sum(t * t, axis=-1, keepdims=True)
        pt = jnp.sum(predict * t, axis=-1, keepdims=True)
        sim_rows = pt * inv_l2(p_sq) * inv_l2(t_sq)              # (4, 1)
        sim_spa_temp = jnp.sum(sim_rows * target_att,
                               axis=(0, 1), keepdims=True)       # (1, 1)

        # ---- forward_temporal ----
        pre_score = jnp.sum(predict, axis=-1, keepdims=True)     # (4, 1)
        ps_sq = jnp.sum(pre_score * pre_score, axis=(0, 1), keepdims=True)
        ts_sq = jnp.sum(target_score * target_score, axis=(0, 1), keepdims=True)
        dot_t = jnp.sum(pre_score * target_score, axis=(0, 1), keepdims=True)
        sim_tempo = dot_t * inv_l2(ps_sq) * inv_l2(ts_sq)        # (1, 1)

        # ---- forward_spatial ----  (mean over the 4 frames)
        pre_sp = jnp.sum(predict, axis=0, keepdims=True) * 0.25  # (1, HW)
        tgt_sp = jnp.sum(t, axis=0, keepdims=True) * 0.25        # (1, HW)
        sp_sq = jnp.sum(pre_sp * pre_sp, axis=-1, keepdims=True)
        tp_sq = jnp.sum(tgt_sp * tgt_sp, axis=-1, keepdims=True)
        dot_sp = jnp.sum(pre_sp * tgt_sp, axis=-1, keepdims=True)
        sim_spa = dot_sp * inv_l2(sp_sq) * inv_l2(tp_sq)         # (1, 1)

        # ---- emit per-batch sims into a lane-dense (1, 1, 128) block ----
        lane = lax.broadcasted_iota(jnp.int32, (1, 1, 128), 2)
        res = (jnp.where(lane == 0, 1.0, 0.0) * sim_spa_temp
               + jnp.where(lane == 1, 1.0, 0.0) * sim_tempo
               + jnp.where(lane == 2, 1.0, 0.0) * sim_spa)
        out_ref[...] = res


def _choose_tiling(C, HW, itemsize, target_block_bytes):
    """Rows per gradient chunk (rows = channels*4, multiple of 8 unless a
    single chunk covers the full C*4 rows)."""
    total_rows = C * 4
    row_bytes = max(1, HW * itemsize)
    max_c = max(2, int(target_block_bytes // (4 * row_bytes)))
    if max_c >= C:
        return total_rows, 1, False            # one full-extent chunk, never ragged
    c_tile = max(2, max_c - (max_c % 2))       # even channels -> rows % 8 == 0
    n_c = -(-C // c_tile)
    rows = c_tile * 4
    ragged = (n_c * rows != total_rows)
    return rows, n_c, ragged


def mal_forward(gradient, xconv, target):
    """Pallas implementation of MAL.forward(gradient, xconv, target)."""
    del xconv  # unused in the PyTorch forward as well
    B, C, T, H, W = gradient.shape
    assert T == 4, "MAL requires a temporal dimension of 4"
    assert target.shape == (B, 4, H, W)

    HW = H * W
    total_rows = C * 4

    # Free (contiguous) reshapes only -- no padded HBM copies of the inputs.
    grad3 = gradient.reshape(B, total_rows, HW)
    tgt3 = target.reshape(B, 4, HW)

    # Generation-aware tiling / VMEM budget (v7x only has 64 MiB VMEM per TC).
    try:
        vmem_cap = pltpu.get_tpu_info().vmem_capacity_bytes
    except Exception:
        vmem_cap = None
    if vmem_cap is not None and vmem_cap >= 100 * 1024 * 1024:   # v5e / v6e
        target_block_bytes = 8 * 1024 * 1024
        vmem_limit = 64 * 1024 * 1024
    else:                                                        # v7x / unknown
        target_block_bytes = 4 * 1024 * 1024
        vmem_limit = 48 * 1024 * 1024

    itemsize = jnp.dtype(gradient.dtype).itemsize
    rows, n_c, ragged = _choose_tiling(C, HW, itemsize, target_block_bytes)

    kernel = functools.partial(_mal_kernel, inv_hw=1.0 / HW,
                               total_rows=total_rows, ragged=ragged)

    bytes_accessed = int(grad3.size * grad3.dtype.itemsize
                         + tgt3.size * tgt3.dtype.itemsize + B * 128 * 4)
    flops = int(B * total_rows * HW              # pooling reduction
                + 2 * B * 4 * total_rows * HW    # selector matmul
                + 16 * B * 4 * HW)               # epilogue dots / norms
    cost = pl.CostEstimate(flops=flops, transcendentals=int(12 * B),
                           bytes_accessed=bytes_accessed)

    # TODO(synk): on v7x with B == 1, split channel chunks over a size-2 parallel
    # axis (two partial accumulators) so both TensorCores get work.
    sims = pl.pallas_call(
        kernel,
        out_shape=jax.ShapeDtypeStruct((B, 1, 128), jnp.float32),
        grid_spec=pltpu.PrefetchScalarGridSpec(
            num_scalar_prefetch=0,
            grid=(B, n_c),
            in_specs=[
                pl.BlockSpec((1, rows, HW), lambda b, c: (b, c, 0)),
                pl.BlockSpec((1, 4, HW), lambda b, c: (b, 0, 0)),
            ],
            out_specs=pl.BlockSpec((1, 1, 128), lambda b, c: (b, 0, 0)),
            scratch_shapes=[pltpu.VMEM((4, HW), jnp.float32)],
        ),
        compiler_params=pltpu.CompilerParams(
            dimension_semantics=("parallel", "arbitrary"),
            vmem_limit_bytes=vmem_limit,
        ),
        cost_estimate=cost,
    )(grad3, tgt3)

    sim_spa_temp = sims[:, 0, 0]
    sim_tempo = sims[:, 0, 1]
    sim_spa = sims[:, 0, 2]
    loss_spa_temp = jnp.mean(1.0 - sim_spa_temp)
    loss_tempo = jnp.mean(1.0 - sim_tempo)
    loss_spa = jnp.mean(1.0 - sim_spa)
    return loss_spa_temp + loss_spa + loss_tempo


def mal_reference(gradient, target):
    """Pure-JAX reference mirroring the PyTorch module (for verification)."""
    B, C, T, H, W = gradient.shape
    g = gradient.astype(jnp.float32)
    t = target.reshape(B, 4, H * W).astype(jnp.float32)

    weight = jnp.mean(g, axis=(3, 4), keepdims=True)             # (B,C,4,1,1)
    predict = jax.nn.relu(jnp.sum(weight * g, axis=1))           # (B,4,H,W)
    p = predict.reshape(B, 4, H * W)

    def l2norm(x):
        n = jnp.sqrt(jnp.sum(x * x, axis=-1, keepdims=True))
        return x / jnp.maximum(n, _EPS)

    target_score = jnp.sum(t, axis=-1)
    target_att = jax.nn.softmax(target_score, axis=1)
    sim_spa_temp = jnp.sum(jnp.sum(l2norm(p) * l2norm(t), axis=-1) * target_att, axis=-1)

    sim_tempo = jnp.sum(l2norm(jnp.sum(p, axis=-1)) * l2norm(target_score), axis=-1)
    sim_spa = jnp.sum(l2norm(jnp.mean(p, axis=1)) * l2norm(jnp.mean(t, axis=1)), axis=-1)

    return (jnp.mean(1.0 - sim_spa_temp)
            + jnp.mean(1.0 - sim_spa)
            + jnp.mean(1.0 - sim_tempo))


if __name__ == "__main__":
    key = jax.random.PRNGKey(0)
    k1, k2, k3 = jax.random.split(key, 3)
    B, C, T, H, W = 2, 4, 4, 16, 16

    gradient = jax.random.normal(k1, (B, C, T, H, W), dtype=jnp.float32)
    xconv = jax.random.normal(k2, (B, C, T, H, W), dtype=jnp.float32)
    target = jax.random.uniform(k3, (B, 4, H, W), dtype=jnp.float32)

    loss = mal_forward(gradient, xconv, target)
    loss = jax.block_until_ready(loss)

    ref = mal_reference(gradient, target)
    assert abs(float(loss) - float(ref)) < 1e-4, (float(loss), float(ref))

    print("KERNEL_OK")
</pallas_src>

<mosaic_0001>
module attributes {stable_mosaic.version = 11 : i64} {
  func.func @_mal_kernel(%arg0: i32, %arg1: i32, %arg2: memref<1x16x256xf32, #tpu.memory_space<vmem>>, %arg3: memref<1x4x256xf32, #tpu.memory_space<vmem>>, %arg4: memref<1x1x128xf32, #tpu.memory_space<vmem>>, %arg5: memref<4x256xf32, #tpu.memory_space<vmem>>) attributes {dimension_semantics = [#tpu.dimension_semantics<parallel>, #tpu.dimension_semantics<arbitrary>], iteration_bounds = array<i64: 2, 1>, scalar_prefetch = 0 : i64, scratch_operands = 1 : i64, tpu.core_type = #tpu.core_type<tc>, window_params = [{transform_indices = @transform_0, window_bounds = array<i64: 1, 16, 256>}, {transform_indices = @transform_1, window_bounds = array<i64: 1, 4, 256>}, {transform_indices = @transform_2, window_bounds = array<i64: 1, 1, 128>}]} {
    %c0_i32 = arith.constant 0 : i32
    %0 = arith.cmpi eq, %arg1, %c0_i32 : i32
    %1 = arith.extui %0 : i1 to i32
    %c0_i32_0 = arith.constant 0 : i32
    %2 = arith.cmpi ne, %1, %c0_i32_0 : i32
    scf.if %2 {
      %cst_15 = arith.constant 0.000000e+00 : f32
      %40 = vector.broadcast %cst_15 : f32 to vector<4x256xf32>
      %c0_16 = arith.constant 0 : index
      %c0_17 = arith.constant 0 : index
      %41 = vector.load %arg5[%c0_16, %c0_17] : memref<4x256xf32, #tpu.memory_space<vmem>>, vector<4x256xf32>
      tpu.vector_store %arg5[%c0_16, %c0_17], %40 {strides = array<i32>} : memref<4x256xf32, #tpu.memory_space<vmem>>, vector<4x256xf32>,
    } else {
    }
    %3 = tpu.iota {dimensions = array<i32: 1>} : vector<4x16xi32>
    %4 = tpu.iota {dimensions = array<i32: 0>} : vector<4x16xi32>
    %c4_i32 = arith.constant 4 : i32
    %c0_i32_1 = arith.constant 0 : i32
    %5 = arith.cmpi eq, %c4_i32, %c0_i32_1 : i32
    %c1_i32 = arith.constant 1 : i32
    %6 = arith.select %5, %c1_i32, %c4_i32 : i32
    %7 = vector.broadcast %6 : i32 to vector<4x16xi32>
    %8 = arith.remsi %3, %7 : vector<4x16xi32>
    %c0_i32_2 = arith.constant 0 : i32
    %9 = vector.broadcast %c0_i32_2 : i32 to vector<4x16xi32>
    %10 = arith.cmpi ne, %8, %9 : vector<4x16xi32>
    %c0_i32_3 = arith.constant 0 : i32
    %11 = vector.broadcast %c0_i32_3 : i32 to vector<4x16xi32>
    %12 = arith.cmpi slt, %8, %11 : vector<4x16xi32>
    %c0_i32_4 = arith.constant 0 : i32
    %13 = arith.cmpi slt, %6, %c0_i32_4 : i32
    %14 = vector.broadcast %13 : i1 to vector<4x16xi1>
    %15 = vector.broadcast %14 : vector<4x16xi1> to vector<4x16xi1>
    %16 = arith.xori %12, %15 : vector<4x16xi1>
    %17 = arith.andi %16, %10 : vector<4x16xi1>
    %18 = vector.broadcast %6 : i32 to vector<4x16xi32>
    %19 = arith.addi %8, %18 : vector<4x16xi32>
    %20 = arith.select %17, %19, %8 : vector<4x16xi1>, vector<4x16xi32>
    %21 = arith.cmpi eq, %20, %4 : vector<4x16xi32>
    %22 = arith.extui %21 : vector<4x16xi1> to vector<4x16xi32>
    %23 = arith.sitofp %22 : vector<4x16xi32> to vector<4x16xf32>
    %c0 = arith.constant 0 : index
    %c0_5 = arith.constant 0 : index
    %c0_6 = arith.constant 0 : index
    %24 = vector.load %arg2[%c0, %c0_5, %c0_6] : memref<1x16x256xf32, #tpu.memory_space<vmem>>, vector<1x16x256xf32>
    %25 = vector.shape_cast %24 : vector<1x16x256xf32> to vector<16x256xf32>
    %cst = arith.constant dense<0.000000e+00> : vector<16xf32>
    %26 = vector.multi_reduction <add>, %25, %cst [1] : vector<16x256xf32> to vector<16xf32>
    %27 = vector.shape_cast %26 : vector<16xf32> to vector<16x1xf32>
    %cst_7 = arith.constant 3.906250e-03 : f32
    %28 = vector.broadcast %cst_7 : f32 to vector<16x1xf32>
    %29 = arith.mulf %27, %28 : vector<16x1xf32>
    %30 = tpu.transpose %29, [1, 0] : vector<16x1xf32> -> vector<1x16xf32>
    %31 = vector.broadcast %30 : vector<1x16xf32> to vector<4x16xf32>
    %32 = arith.mulf %23, %31 : vector<4x16xf32>
    %c0_8 = arith.constant 0 : index
    %c0_9 = arith.constant 0 : index
    %33 = vector.load %arg5[%c0_8, %c0_9] : memref<4x256xf32, #tpu.memory_space<vmem>>, vector<4x256xf32>
    %cst_10 = arith.constant dense<0.000000e+00> : vector<4x256xf32>
    %34 = tpu.matmul %32, %25, %cst_10 {dimension_numbers = #tpu.dot_dimension_numbers<[1], [0], [0], [1], [0, 0, 1, 1], [], []>} : vector<4x16xf32>, vector<16x256xf32>, vector<4x256xf32> -> vector<4x256xf32>
    %35 = arith.addf %33, %34 : vector<4x256xf32>
    %c0_11 = arith.constant 0 : index
    %c0_12 = arith.constant 0 : index
    %36 = vector.load %arg5[%c0_11, %c0_12] : memref<4x256xf32, #tpu.memory_space<vmem>>, vector<4x256xf32>
    tpu.vector_store %arg5[%c0_11, %c0_12], %35 {strides = array<i32>} : memref<4x256xf32, #tpu.memory_space<vmem>>, vector<4x256xf32>,
    %c0_i32_13 = arith.constant 0 : i32
    %37 = arith.cmpi eq, %arg1, %c0_i32_13 : i32
    %38 = arith.extui %37 : i1 to i32
    %c0_i32_14 = arith.constant 0 : i32
    %39 = arith.cmpi ne, %38, %c0_i32_14 : i32
    scf.if %39 {
      %c0_15 = arith.constant 0 : index
      %c0_16 = arith.constant 0 : index
      %40 = vector.load %arg5[%c0_15, %c0_16] : memref<4x256xf32, #tpu.memory_space<vmem>>, vector<4x256xf32>
      %cst_17 = arith.constant 0.000000e+00 : f32
      %41 = vector.broadcast %cst_17 : f32 to vector<4x256xf32>
      %42 = arith.maximumf %40, %41 : vector<4x256xf32>
      %c0_18 = arith.constant 0 : index
      %c0_19 = arith.constant 0 : index
      %c0_20 = arith.constant 0 : index
      %43 = vector.load %arg3[%c0_18, %c0_19, %c0_20] : memref<1x4x256xf32, #tpu.memory_space<vmem>>, vector<1x4x256xf32>
      %44 = vector.shape_cast %43 : vector<1x4x256xf32> to vector<4x256xf32>
      %cst_21 = arith.constant dense<0.000000e+00> : vector<4xf32>
      %45 = vector.multi_reduction <add>, %44, %cst_21 [1] : vector<4x256xf32> to vector<4xf32>
      %46 = vector.shape_cast %45 : vector<4xf32> to vector<4x1xf32>
      %cst_22 = arith.constant dense<0xFF800000> : vector<1xf32>
      %47 = vector.multi_reduction <maximumf>, %46, %cst_22 [0] : vector<4x1xf32> to vector<1xf32>
      %48 = vector.shape_cast %47 : vector<1xf32> to vector<1x1xf32>
      %49 = vector.broadcast %48 : vector<1x1xf32> to vector<4x1xf32>
      %50 = arith.subf %46, %49 : vector<4x1xf32>
      %51 = math.exp %50 : vector<4x1xf32>
      %cst_23 = arith.constant dense<0.000000e+00> : vector<1xf32>
      %52 = vector.multi_reduction <add>, %51, %cst_23 [0] : vector<4x1xf32> to vector<1xf32>
      %53 = vector.shape_cast %52 : vector<1xf32> to vector<1x1xf32>
      %54 = vector.broadcast %53 : vector<1x1xf32> to vector<4x1xf32>
      %55 = arith.divf %51, %54 : vector<4x1xf32>
      %56 = arith.mulf %42, %42 : vector<4x256xf32>
      %cst_24 = arith.constant dense<0.000000e+00> : vector<4xf32>
      %57 = vector.multi_reduction <add>, %56, %cst_24 [1] : vector<4x256xf32> to vector<4xf32>
      %58 = vector.shape_cast %57 : vector<4xf32> to vector<4x1xf32>
      %59 = arith.mulf %44, %44 : vector<4x256xf32>
      %cst_25 = arith.constant dense<0.000000e+00> : vector<4xf32>
      %60 = vector.multi_reduction <add>, %59, %cst_25 [1] : vector<4x256xf32> to vector<4xf32>
      %61 = vector.shape_cast %60 : vector<4xf32> to vector<4x1xf32>
      %62 = arith.mulf %42, %44 : vector<4x256xf32>
      %cst_26 = arith.constant dense<0.000000e+00> : vector<4xf32>
      %63 = vector.multi_reduction <add>, %62, %cst_26 [1] : vector<4x256xf32> to vector<4xf32>
      %64 = vector.shape_cast %63 : vector<4xf32> to vector<4x1xf32>
      %cst_27 = arith.constant 1.000000e-24 : f32
      %65 = vector.broadcast %cst_27 : f32 to vector<4x1xf32>
      %66 = arith.maximumf %58, %65 : vector<4x1xf32>
      %67 = math.rsqrt %66 : vector<4x1xf32>
      %68 = arith.mulf %64, %67 : vector<4x1xf32>
      %cst_28 = arith.constant 1.000000e-24 : f32
      %69 = vector.broadcast %cst_28 : f32 to vector<4x1xf32>
      %70 = arith.maximumf %61, %69 : vector<4x1xf32>
      %71 = math.rsqrt %70 : vector<4x1xf32>
      %72 = arith.mulf %68, %71 : vector<4x1xf32>
      %73 = arith.mulf %72, %55 : vector<4x1xf32>
      %74 = vector.shape_cast %73 : vector<4x1xf32> to vector<1x4x1xf32>
      %cst_29 = arith.constant dense<0.000000e+00> : vector<1xf32>
      %75 = vector.multi_reduction <add>, %74, %cst_29 [1, 2] : vector<1x4x1xf32> to vector<1xf32>
      %76 = vector.shape_cast %75 : vector<1xf32> to vector<1x1x1xf32>
      %77 = vector.extract %76[0, 0, 0] : f32 from vector<1x1x1xf32>
      %78 = vector.broadcast %77 : f32 to vector<1x1xf32>
      %cst_30 = arith.constant dense<0.000000e+00> : vector<4xf32>
      %79 = vector.multi_reduction <add>, %42, %cst_30 [1] : vector<4x256xf32> to vector<4xf32>
      %80 = vector.shape_cast %79 : vector<4xf32> to vector<4x1xf32>
      %81 = arith.mulf %80, %80 : vector<4x1xf32>
      %82 = vector.shape_cast %81 : vector<4x1xf32> to vector<1x4x1xf32>
      %cst_31 = arith.constant dense<0.000000e+00> : vector<1xf32>
      %83 = vector.multi_reduction <add>, %82, %cst_31 [1, 2] : vector<1x4x1xf32> to vector<1xf32>
      %84 = vector.shape_cast %83 : vector<1xf32> to vector<1x1x1xf32>
      %85 = vector.extract %84[0, 0, 0] : f32 from vector<1x1x1xf32>
      %86 = vector.broadcast %85 : f32 to vector<1x1xf32>
      %87 = arith.mulf %46, %46 : vector<4x1xf32>
      %88 = vector.shape_cast %87 : vector<4x1xf32> to vector<1x4x1xf32>
      %cst_32 = arith.constant dense<0.000000e+00> : vector<1xf32>
      %89 = vector.multi_reduction <add>, %88, %cst_32 [1, 2] : vector<1x4x1xf32> to vector<1xf32>
      %90 = vector.shape_cast %89 : vector<1xf32> to vector<1x1x1xf32>
      %91 = vector.extract %90[0, 0, 0] : f32 from vector<1x1x1xf32>
      %92 = vector.broadcast %91 : f32 to vector<1x1xf32>
      %93 = arith.mulf %80, %46 : vector<4x1xf32>
      %94 = vector.shape_cast %93 : vector<4x1xf32> to vector<1x4x1xf32>
      %cst_33 = arith.constant dense<0.000000e+00> : vector<1xf32>
      %95 = vector.multi_reduction <add>, %94, %cst_33 [1, 2] : vector<1x4x1xf32> to vector<1xf32>
      %96 = vector.shape_cast %95 : vector<1xf32> to vector<1x1x1xf32>
      %97 = vector.extract %96[0, 0, 0] : f32 from vector<1x1x1xf32>
      %98 = vector.broadcast %97 : f32 to vector<1x1xf32>
      %cst_34 = arith.constant 1.000000e-24 : f32
      %99 = vector.broadcast %cst_34 : f32 to vector<1x1xf32>
      %100 = arith.maximumf %86, %99 : vector<1x1xf32>
      %101 = math.rsqrt %100 : vector<1x1xf32>
      %102 = arith.mulf %98, %101 : vector<1x1xf32>
      %cst_35 = arith.constant 1.000000e-24 : f32
      %103 = vector.broadcast %cst_35 : f32 to vector<1x1xf32>
      %104 = arith.maximumf %92, %103 : vector<1x1xf32>
      %105 = math.rsqrt %104 : vector<1x1xf32>
      %106 = arith.mulf %102, %105 : vector<1x1xf32>
      %cst_36 = arith.constant dense<0.000000e+00> : vector<256xf32>
      %107 = vector.multi_reduction <add>, %42, %cst_36 [0] : vector<4x256xf32> to vector<256xf32>
      %108 = vector.shape_cast %107 : vector<256xf32> to vector<1x256xf32>
      %cst_37 = arith.constant 2.500000e-01 : f32
      %109 = vector.broadcast %cst_37 : f32 to vector<1x256xf32>
      %110 = arith.mulf %108, %109 : vector<1x256xf32>
      %cst_38 = arith.constant dense<0.000000e+00> : vector<256xf32>
      %111 = vector.multi_reduction <add>, %44, %cst_38 [0] : vector<4x256xf32> to vector<256xf32>
      %112 = vector.shape_cast %111 : vector<256xf32> to vector<1x256xf32>
      %cst_39 = arith.constant 2.500000e-01 : f32
      %113 = vector.broadcast %cst_39 : f32 to vector<1x256xf32>
      %114 = arith.mulf %112, %113 : vector<1x256xf32>
      %115 = arith.mulf %110, %110 : vector<1x256xf32>
      %cst_40 = arith.constant dense<0.000000e+00> : vector<1xf32>
      %116 = vector.multi_reduction <add>, %115, %cst_40 [1] : vector<1x256xf32> to vector<1xf32>
      %117 = vector.shape_cast %116 : vector<1xf32> to vector<1x1xf32>
      %118 = arith.mulf %114, %114 : vector<1x256xf32>
      %cst_41 = arith.constant dense<0.000000e+00> : vector<1xf32>
      %119 = vector.multi_reduction <add>, %118, %cst_41 [1] : vector<1x256xf32> to vector<1xf32>
      %120 = vector.shape_cast %119 : vector<1xf32> to vector<1x1xf32>
      %121 = arith.mulf %110, %114 : vector<1x256xf32>
      %cst_42 = arith.constant dense<0.000000e+00> : vector<1xf32>
      %122 = vector.multi_reduction <add>, %121, %cst_42 [1] : vector<1x256xf32> to vector<1xf32>
      %123 = vector.shape_cast %122 : vector<1xf32> to vector<1x1xf32>
      %cst_43 = arith.constant 1.000000e-24 : f32
      %124 = vector.broadcast %cst_43 : f32 to vector<1x1xf32>
      %125 = arith.maximumf %117, %124 : vector<1x1xf32>
      %126 = math.rsqrt %125 : vector<1x1xf32>
      %127 = arith.mulf %123, %126 : vector<1x1xf32>
      %cst_44 = arith.constant 1.000000e-24 : f32
      %128 = vector.broadcast %cst_44 : f32 to vector<1x1xf32>
      %129 = arith.maximumf %120, %128 : vector<1x1xf32>
      %130 = math.rsqrt %129 : vector<1x1xf32>
      %131 = arith.mulf %127, %130 : vector<1x1xf32>
      %132 = tpu.iota {dimensions = array<i32: 2>} : vector<1x1x128xi32>
      %c0_i32_45 = arith.constant 0 : i32
      %133 = vector.broadcast %c0_i32_45 : i32 to vector<1x1x128xi32>
      %134 = arith.cmpi eq, %132, %133 : vector<1x1x128xi32>
      %cst_46 = arith.constant 1.000000e+00 : f32
      %cst_47 = arith.constant 0.000000e+00 : f32
      %135 = vector.broadcast %cst_46 : f32 to vector<1x1x128xf32>
      %136 = vector.broadcast %cst_47 : f32 to vector<1x1x128xf32>
      %137 = arith.select %134, %135, %136 : vector<1x1x128xi1>, vector<1x1x128xf32>
      %138 = vector.shape_cast %78 : vector<1x1xf32> to vector<1x1x1xf32>
      %139 = vector.broadcast %138 : vector<1x1x1xf32> to vector<1x1x128xf32>
      %140 = arith.mulf %137, %139 : vector<1x1x128xf32>
      %c1_i32_48 = arith.constant 1 : i32
      %141 = vector.broadcast %c1_i32_48 : i32 to vector<1x1x128xi32>
      %142 = arith.cmpi eq, %132, %141 : vector<1x1x128xi32>
      %cst_49 = arith.constant 1.000000e+00 : f32
      %cst_50 = arith.constant 0.000000e+00 : f32
      %143 = vector.broadcast %cst_49 : f32 to vector<1x1x128xf32>
      %144 = vector.broadcast %cst_50 : f32 to vector<1x1x128xf32>
      %145 = arith.select %142, %143, %144 : vector<1x1x128xi1>, vector<1x1x128xf32>
      %146 = vector.shape_cast %106 : vector<1x1xf32> to vector<1x1x1xf32>
      %147 = vector.broadcast %146 : vector<1x1x1xf32> to vector<1x1x128xf32>
      %148 = arith.mulf %145, %147 : vector<1x1x128xf32>
      %149 = arith.addf %140, %148 : vector<1x1x128xf32>
      %c2_i32 = arith.constant 2 : i32
      %150 = vector.broadcast %c2_i32 : i32 to vector<1x1x128xi32>
      %151 = arith.cmpi eq, %132, %150 : vector<1x1x128xi32>
      %cst_51 = arith.constant 1.000000e+00 : f32
      %cst_52 = arith.constant 0.000000e+00 : f32
      %152 = vector.broadcast %cst_51 : f32 to vector<1x1x128xf32>
      %153 = vector.broadcast %cst_52 : f32 to vector<1x1x128xf32>
      %154 = arith.select %151, %152, %153 : vector<1x1x128xi1>, vector<1x1x128xf32>
      %155 = vector.shape_cast %131 : vector<1x1xf32> to vector<1x1x1xf32>
      %156 = vector.broadcast %155 : vector<1x1x1xf32> to vector<1x1x128xf32>
      %157 = arith.mulf %154, %156 : vector<1x1x128xf32>
      %158 = arith.addf %149, %157 : vector<1x1x128xf32>
      %c0_53 = arith.constant 0 : index
      %c0_54 = arith.constant 0 : index
      %c0_55 = arith.constant 0 : index
      %159 = vector.load %arg4[%c0_53, %c0_54, %c0_55] : memref<1x1x128xf32, #tpu.memory_space<vmem>>, vector<1x1x128xf32>
      tpu.vector_store %arg4[%c0_53, %c0_54, %c0_55], %158 {strides = array<i32>} : memref<1x1x128xf32, #tpu.memory_space<vmem>>, vector<1x1x128xf32>,
    } else {
    }
    return
  }
  func.func @transform_0(%arg0: i32, %arg1: i32) -> (i32, i32, i32) {
    %c0_i32 = arith.constant 0 : i32
    %c0_i32_0 = arith.constant 0 : i32
    return %arg0, %arg1, %c0_i32 : i32, i32, i32
  }
  func.func @transform_1(%arg0: i32, %arg1: i32) -> (i32, i32, i32) {
    %c0_i32 = arith.constant 0 : i32
    %c0_i32_0 = arith.constant 0 : i32
    %c0_i32_1 = arith.constant 0 : i32
    return %arg0, %c0_i32, %c0_i32_0 : i32, i32, i32
  }
  func.func @transform_2(%arg0: i32, %arg1: i32) -> (i32, i32, i32) {
    %c0_i32 = arith.constant 0 : i32
    %c0_i32_0 = arith.constant 0 : i32
    %c0_i32_1 = arith.constant 0 : i32
    return %arg0, %c0_i32, %c0_i32_0 : i32, i32, i32
  }
}

</mosaic_0001>

<llo_original>
// kernel: tpu_custom_call.1
$region0: #{tpu_custom_call.1}
  #allocation0 [shape = 'u32[]', space=smem, size = 0x4, offset = 0x4, fixed_abs, tag = 'smem constant byte address 0x4 - core index']
  #allocation1 [shape = 'u32[144,128]{1,0:T(1,128)}', space=vmem, size = 0x12000, scoped, tag = 'internal scratch']
  #allocation2 [shape = 'f32[4,256]{1,0:T(4,128)}', space=vmem, size = 0x1000, scoped, tag = 'scratch operand']
  %s0 = inlined_call_operand.hbm [shape: f32[2,16,256], index: 0, kind: input, shape index: {}]
  %s1 = inlined_call_operand.hbm [shape: f32[2,4,256], index: 1, kind: input, shape index: {}]
  %s2 = inlined_call_operand.hbm [shape: f32[2,1,128], index: 2, kind: output, shape index: {}]
  %s3 = sld [smem:[#allocation0]]
  $region57: #{tpu_custom_call.1} parent=0
    _
  %s5 = ssub.s32 1, %s3
  %s6 = scalar_select 0, %s5, %s3
  $region1: #{tpu_custom_call.1} parent=0
    #allocation3 [shape = 'u8[32768]{0}', space=vmem, size = 0x8000, scoped, tag = 'input window, operand 0']
    #allocation4 [shape = 's32[2]{0}', space=sflag, size = 0x8, scoped, tag = 'scoped memory for tpu_custom_call.1']
    #allocation5 [shape = 's32[2]{0}', space=sflag, size = 0x8, scoped, tag = 'scoped memory for tpu_custom_call.1']
    #allocation6 [shape = 'u8[8192]{0}', space=vmem, size = 0x2000, scoped, tag = 'input window, operand 1']
    #allocation7 [shape = 's32[2]{0}', space=sflag, size = 0x8, scoped, tag = 'scoped memory for tpu_custom_call.1']
    #allocation8 [shape = 'u8[1024]{0}', space=vmem, size = 0x400, scoped, tag = 'output window, operand 0']
    %7 = vsyncpa [#allocation4], 0
    %s8 = scalar_lea.sflag [#allocation4], 1
    %9 = vsyncpa %s8, 0
    %10 = vsyncpa [#allocation7], 0
    %s11 = scalar_lea.sflag [#allocation7], 1
    %12 = vsyncpa %s11, 0
    %13 = vsyncpa [#allocation5], 0
    %s14 = scalar_lea.sflag [#allocation5], 1
    %15 = vsyncpa %s14, 0
    loop: start=0, step=1, limit=4
    $region2: #{tpu_custom_call.1} parent=1 // loop_pre_header
      _
    $region3: #{tpu_custom_call.1} parent=1 // loop_header
      %s17 = sphi 0, %s21
      %p18 = scmp.ge.s32.totalorder %s17, 4
      %s24 = sphi 0, %s36
      %s25 = sphi 0, %s32
      %s26 = sphi 0, %s24
      %s27 = sphi 0, %s25
      %s28 = sphi 0, %s26
      %s29 = sphi 0, %s27
      %s41 = sphi 0, %s43
      %s44 = sphi 0, %s41
      %s45 = sphi 0, %s44
      %s61 = sphi 0, %s45
      %s67 = sphi 0, %s69
      %s70 = sphi 0, %s67
      %s71 = sphi 0, %s70
      %s87 = sphi 0, %s71
      %s93 = sphi 0, %s95
      %s96 = sphi 0, %s93
      %s97 = sphi 0, %s96
      %s113 = sphi 0, %s97
    $region4: #{tpu_custom_call.1} parent=1 // loop_header_branch
      %20 = sbr.rel (%p18) target = $region8
    $region5: #{tpu_custom_call.1} parent=1 // loop_body
      %s22 = ssub.s32 %s17, 1
      %s23 = ssub.s32 %s17, 2
      %s30 = sadd.s32 1, %s25
      %p31 = scmp.ge.s32.totalorder %s30, 1
      %s32 = scalar_select %p31, 0, %s30
      %s33 = sadd.s32 1, %s24
      %s34 = scalar_select %p31, %s33, %s24
      %p35 = scmp.ge.s32.totalorder %s34, 2
      %s36 = scalar_select %p35, 0, %s34
      %s37 = ssub.s32 %s24, %s36
      %s38 = ssub.s32 %s25, %s32
      %s39 = sor.u32 %s37, %s38
      %p40 = scmp.eq.s32.totalorder %s39, 0
      %s42 = sadd.s32 %s41, 1
      %s43 = scalar_select %p40, %s41, %s42
      %p46 = pneg %p40
      %p47 = scmp.eq.s32.totalorder %s17, 1
      %p48 = por %p46, %p47
      %p49 = scmp.ne.s32.totalorder %s41, %s44
      %p50 = scmp.eq.s32.totalorder %s17, 0
      %p51 = por %p49, %p50
      %p52 = scmp.ne.s32.totalorder %s41, %s44
      %p53 = scmp.eq.s32.totalorder %s22, 1
      %p54 = por %p52, %p53
      %p55 = scmp.ne.s32.totalorder %s44, %s45
      %p56 = scmp.eq.s32.totalorder %s22, 0
      %p57 = por %p55, %p56
      %p58 = scmp.ne.s32.totalorder %s44, %s45
      %p59 = scmp.eq.s32.totalorder %s23, 1
      %p60 = por %p58, %p59
      %p62 = scmp.ne.s32.totalorder %s45, %s61
      %p63 = scmp.eq.s32.totalorder %s23, 0
      %p64 = por %p62, %p63
      %s65 = ssub.s32 %s24, %s36
      %p66 = scmp.eq.s32.totalorder %s65, 0
      %s68 = sadd.s32 %s67, 1
      %s69 = scalar_select %p66, %s67, %s68
      %p72 = pneg %p66
      %p73 = scmp.eq.s32.totalorder %s17, 1
      %p74 = por %p72, %p73
      %p75 = scmp.ne.s32.totalorder %s67, %s70
      %p76 = scmp.eq.s32.totalorder %s17, 0
      %p77 = por %p75, %p76
      %p78 = scmp.ne.s32.totalorder %s67, %s70
      %p79 = scmp.eq.s32.totalorder %s22, 1
      %p80 = por %p78, %p79
      %p81 = scmp.ne.s32.totalorder %s70, %s71
      %p82 = scmp.eq.s32.totalorder %s22, 0
      %p83 = por %p81, %p82
      %p84 = scmp.ne.s32.totalorder %s70, %s71
      %p85 = scmp.eq.s32.totalorder %s23, 1
      %p86 = por %p84, %p85
      %p88 = scmp.ne.s32.totalorder %s71, %s87
      %p89 = scmp.eq.s32.totalorder %s23, 0
      %p90 = por %p88, %p89
      %s91 = ssub.s32 %s24, %s36
      %p92 = scmp.eq.s32.totalorder %s91, 0
      %s94 = sadd.s32 %s93, 1
      %s95 = scalar_select %p92, %s93, %s94
      %p98 = pneg %p92
      %p99 = scmp.eq.s32.totalorder %s17, 1
      %p100 = por %p98, %p99
      %p101 = scmp.ne.s32.totalorder %s93, %s96
      %p102 = scmp.eq.s32.totalorder %s17, 0
      %p103 = por %p101, %p102
      %p104 = scmp.ne.s32.totalorder %s93, %s96
      %p105 = scmp.eq.s32.totalorder %s22, 1
      %p106 = por %p104, %p105
      %p107 = scmp.ne.s32.totalorder %s96, %s97
      %p108 = scmp.eq.s32.totalorder %s22, 0
      %p109 = por %p107, %p108
      %p110 = scmp.ne.s32.totalorder %s96, %s97
      %p111 = scmp.eq.s32.totalorder %s23, 1
      %p112 = por %p110, %p111
      %p114 = scmp.ne.s32.totalorder %s97, %s113
      %p115 = scmp.eq.s32.totalorder %s23, 0
      %p116 = por %p114, %p115
      %p117 = scmp.le.s32.totalorder 1, %s17
      %p118 = scmp.lt.s32.totalorder %s17, 3
      %p119 = pnand %p117, %p118
      %p120 = pneg %p119
      // Predicated region
      $region9: #{tpu_custom_call.1} parent=5 // pred_check
        _
      $region10: #{tpu_custom_call.1} parent=5 // pred_check_branch
        %122 = sbr.rel (%p119) target = $region12
      $region11: #{tpu_custom_call.1} parent=5 // pred_region
        %s123 = ssub.s32 %s17, 1
      $region12: #{tpu_custom_call.1} parent=5 // pred_fallthru
        _
      %p124 = scmp.lt.s32.totalorder %s17, 2
      // Predicated region
      $region13: #{tpu_custom_call.1} parent=5 // pred_check
        %p125 = pneg %p124
      $region14: #{tpu_custom_call.1} parent=5 // pred_check_branch
        %127 = sbr.rel (%p125) target = $region16
      $region15: #{tpu_custom_call.1} parent=5 // pred_region
        // Predicated region
        $region17: #{tpu_custom_call.1} parent=15 // pred_check
          %p128 = pneg %p51
        $region18: #{tpu_custom_call.1} parent=15 // pred_check_branch
          %130 = sbr.rel (%p128) target = $region20
        $region19: #{tpu_custom_call.1} parent=15 // pred_region
          %s131 = sand.u32 %s41, 1
          %s132 = scalar_lea.sflag [#allocation4], %s131
          %s133 = sand.u32 %s41, 1
          %s134 = smul.addr %s133, 32
          %s135 = scalar_lea.vmem [#allocation3], %s134
          %s136 = smul.u32 2, %s25
          %s138 = ssub.s32 512, 512
          %139 = vsyncadd %s132, %s138
          %s140 = smul.addr %s136, 2
          %s141 = smul.addr %s24, 4
          %s142 = sadd.s32 %s140, %s141
          %s143 = smul.addr %s142, 128
          %s144 = scalar_lea.hbm %s0, %s143
          %s145 = sshll.u32 %s135, 4
          %s146 = int_to_ptr.vmem [resolvable:$true] %s145
          %151 = dma.hbm_to_vmem [thread:$0]  %s144, 512, %s146, %s132, 256, 256, 16
        $region20: #{tpu_custom_call.1} parent=15 // pred_fallthru
          _
        // Predicated region
        $region21: #{tpu_custom_call.1} parent=15 // pred_check
          %p152 = pneg %p77
        $region22: #{tpu_custom_call.1} parent=15 // pred_check_branch
          %154 = sbr.rel (%p152) target = $region24
        $region23: #{tpu_custom_call.1} parent=15 // pred_region
          %s155 = sand.u32 %s67, 1
          %s156 = scalar_lea.sflag [#allocation7], %s155
          %s157 = sand.u32 %s67, 1
          %s158 = smul.addr %s157, 8
          %s159 = scalar_lea.vmem [#allocation6], %s158
          %s161 = ssub.s32 128, 128
          %162 = vsyncadd %s156, %s161
          %s163 = smul.addr %s24, 2
          %s164 = smul.addr %s163, 64
          %s165 = scalar_lea.hbm %s1, %s164
          %s167 = sshll.u32 %s159, 4
          %s168 = int_to_ptr.vmem [resolvable:$true] %s167
          %170 = dma.hbm_to_vmem [thread:$0]  %s165, 128, %s168, %s156
        $region24: #{tpu_custom_call.1} parent=15 // pred_fallthru
          _
      $region16: #{tpu_custom_call.1} parent=5 // pred_fallthru
        _
      %p171 = scmp.le.s32.totalorder 1, %s17
      %p172 = scmp.lt.s32.totalorder %s17, 3
      %p173 = pnand %p171, %p172
      %p174 = pneg %p173
      // Predicated region
      $region25: #{tpu_custom_call.1} parent=5 // pred_check
        _
      $region26: #{tpu_custom_call.1} parent=5 // pred_check_branch
        %176 = sbr.rel (%p173) target = $region28
      $region27: #{tpu_custom_call.1} parent=5 // pred_region
        %s177 = ssub.s32 %s17, 1
        %s178 = sand.u32 %s44, 1
        %s179 = scalar_lea.sflag [#allocation4], %s178
        %s180 = sand.u32 %s44, 1
        %s181 = smul.addr %s180, 32
        %s182 = scalar_lea.vmem [#allocation3], %s181
        // Predicated region
        $region29: #{tpu_custom_call.1} parent=27 // pred_check
          %p183 = pneg %p57
        $region30: #{tpu_custom_call.1} parent=27 // pred_check_branch
          %185 = sbr.rel (%p183) target = $region32
        $region31: #{tpu_custom_call.1} parent=27 // pred_region
          %186 = dma.done %s179, 512
        $region32: #{tpu_custom_call.1} parent=27 // pred_fallthru
          _
        %s187 = sand.u32 %s70, 1
        %s188 = scalar_lea.sflag [#allocation7], %s187
        %s189 = sand.u32 %s70, 1
        %s190 = smul.addr %s189, 8
        %s191 = scalar_lea.vmem [#allocation6], %s190
        // Predicated region
        $region33: #{tpu_custom_call.1} parent=27 // pred_check
          %p192 = pneg %p83
        $region34: #{tpu_custom_call.1} parent=27 // pred_check_branch
          %194 = sbr.rel (%p192) target = $region36
        $region35: #{tpu_custom_call.1} parent=27 // pred_region
          %195 = dma.done %s188, 128
        $region36: #{tpu_custom_call.1} parent=27 // pred_fallthru
          _
        %s196 = sand.u32 %s44, 1
        %s197 = scalar_lea.sflag [#allocation4], %s196
        %s198 = sand.u32 %s44, 1
        %s199 = smul.addr %s198, 32
        %s200 = scalar_lea.vmem [#allocation3], %s199
        %p201 = pneg %p57
        %p202 = pneg %p54
        %s203 = sand.u32 %s70, 1
        %s204 = scalar_lea.sflag [#allocation7], %s203
        %s205 = sand.u32 %s70, 1
        %s206 = smul.addr %s205, 8
        %s207 = scalar_lea.vmem [#allocation6], %s206
        %p208 = pneg %p83
        %p209 = pneg %p80
        %p210 = pneg %p109
        %p211 = pneg %p106
        %s212 = sand.u32 %s96, 1
        %s213 = scalar_lea.sflag [#allocation5], %s212
        %s214 = sand.u32 %s96, 1
        %s215 = scalar_lea.vmem [#allocation8], %s214
        %s216 = smul.u32 2, %s27
        %p217 = scmp.eq.s32.totalorder %s27, 0
        // Predicated region
        $region37: #{tpu_custom_call.1} parent=27 // pred_check
          %p218 = pneg %p217
        $region38: #{tpu_custom_call.1} parent=27 // pred_check_branch
          %220 = sbr.rel (%p218) target = $region40
        $region39: #{tpu_custom_call.1} parent=27 // pred_region
          %221 = vst [vmem:[#allocation2] sm:$0xff] 0.0
        $region40: #{tpu_custom_call.1} parent=27 // pred_fallthru
          _
        %v222 = vlaneseq
        %v223 = vand.u32 %v222, 127
        %v224 = vlaneseq
        %v225 = vshrl.u32 %v224, 7
        %vm226 = vcmp.lt.s32.totalorder %v223, 0
        %v227 = vsub.s32 0, %v223
        %v228 = vsel %vm226, %v227, %v223
        %v229 = vshrl.u32 %v228, 2
        %v230 = vand.u32 %v228, 3
        %v231 = vsub.s32 0, %v230
        %v232 = vsel %vm226, %v231, %v230
        %vm233 = vcmp.ne.s32.totalorder %v232, 0
        %vm234 = vcmp.lt.s32.totalorder %v232, 0
        %vm235 = vmand %vm234, %vm233
        %v236 = vadd.s32 %v232, 4
        %v237 = vsel %vm235, %v236, %v232
        %vm238 = vcmp.eq.s32.totalorder %v237, %v225
        %v239 = vsel %vm238, 1, 0
        %v240 = vcvt.s32.f32 %v239
        %v241 = vld [vmem:[%s182] sm:$0xff]
        %v242 = vld [vmem:[%s182 + $0x8] sm:$0xff]
        %v243 = vld [vmem:[%s182 + $0x10] sm:$0xff]
        %v244 = vld [vmem:[%s182 + $0x18] sm:$0xff]
        %v245 = vadd.f32 %v241, %v242
        %246 = vadd.xlane.f32.xlu0 %v245
        %v247 = vpop.xlane.xlu0 %246
        %v248 = vadd.f32 %v243, %v244
        %249 = vadd.xlane.f32.xlu0 %v248
        %v250 = vpop.xlane.xlu0 %249
        %v251 = vmul.f32 %v247, 0.00390625
        %v252 = vmul.f32 %v250, 0.00390625
        %253 = vxpose.xlu0.b32.start [1/16] %v251, 128
        %254 = vxpose.xlu0.b32.cont [2/16] %v252, 128
        %255 = vxpose.xlu0.b32.cont [3/16] 0.0, 128
        %256 = vxpose.xlu0.b32.cont [4/16] 0.0, 128
        %257 = vxpose.xlu0.b32.cont [5/16] 0.0, 128
        %258 = vxpose.xlu0.b32.cont [6/16] 0.0, 128
        %259 = vxpose.xlu0.b32.cont [7/16] 0.0, 128
        %260 = vxpose.xlu0.b32.cont [8/16] 0.0, 128
        %261 = vxpose.xlu0.b32.cont [9/16] 0.0, 128
        %262 = vxpose.xlu0.b32.cont [10/16] 0.0, 128
        %263 = vxpose.xlu0.b32.cont [11/16] 0.0, 128
        %264 = vxpose.xlu0.b32.cont [12/16] 0.0, 128
        %265 = vxpose.xlu0.b32.cont [13/16] 0.0, 128
        %266 = vxpose.xlu0.b32.cont [14/16] 0.0, 128
        %267 = vxpose.xlu0.b32.cont [15/16] 0.0, 128
        %268 = vxpose.xlu0.b32.end [16/16] 0.0, 128
        %v269 = vpop.trf.xlu0
        %v270 = vpop.trf.xlu0
        %v271 = vpop.trf.xlu0
        %v272 = vpop.trf.xlu0
        %v273 = vpop.trf.xlu0
        %v274 = vpop.trf.xlu0
        %v275 = vpop.trf.xlu0
        %v276 = vpop.trf.xlu0
        %v277 = vpop.trf.xlu0
        %v278 = vpop.trf.xlu0
        %v279 = vpop.trf.xlu0
        %v280 = vpop.trf.xlu0
        %v281 = vpop.trf.xlu0
        %v282 = vpop.trf.xlu0
        %v283 = vpop.trf.xlu0
        %v284 = vpop.trf.xlu0
        %v285 = vlaneseq
        %v286 = vshrl.u32 %v285, 7
        %v287 = vsub.s32 0, %v286
        %v288 = vrot.slane %v269, %v287
        %v289 = vmul.f32 %v240, %v288
        %v290 = vld [vmem:[#allocation2] sm:$0xff]
        %vm291 = vcmask 130048
        %v293 = vsel %vm291, %v289, 0
        %295 = vmatprep.subr.mxu0 %v242
        %296 = vmatpush1.msra.mxu0 %v241
        %297 = vmatprep.subr.mxu0 %v244
        %298 = vmatpush1.msra.mxu0 %v243
        %299 = vmatprep.subr.mxu0 0.0
        %300 = vmatpush1.msra.mxu0 0.0
        %301 = vmatprep.subr.mxu0 0.0
        %302 = vmatpush1.msra.mxu0 0.0
        %303 = vmatprep.subr.mxu0 0.0
        %304 = vmatpush1.msra.mxu0 0.0
        %305 = vmatprep.subr.mxu0 0.0
        %306 = vmatpush1.msra.mxu0 0.0
        %307 = vmatprep.subr.mxu0 0.0
        %308 = vmatpush1.msra.mxu0 0.0
        %309 = vmatprep.subr.mxu0 0.0
        %310 = vmatpush1.msra.mxu0 0.0
        %311 = vmatprep.subr.mxu0 0.0
        %312 = vmatpush1.msra.mxu0 0.0
        %313 = vmatprep.subr.mxu0 0.0
        %314 = vmatpush1.msra.mxu0 0.0
        %315 = vmatprep.subr.mxu0 0.0
        %316 = vmatpush1.msra.mxu0 0.0
        %317 = vmatprep.subr.mxu0 0.0
        %318 = vmatpush1.msra.mxu0 0.0
        %319 = vmatprep.subr.mxu0 0.0
        %320 = vmatpush1.msra.mxu0 0.0
        %321 = vmatprep.subr.mxu0 0.0
        %322 = vmatpush1.msra.mxu0 0.0
        %323 = vmatprep.subr.mxu0 0.0
        %324 = vmatpush1.msra.mxu0 0.0
        %325 = vmatprep.subr.mxu0 0.0
        %326 = vmatpush1.msra.mxu0 0.0
        %327 = vmatprep.subr.mxu0 0.0
        %328 = vmatpush1.msra.mxu0 0.0
        %329 = vmatprep.subr.mxu0 0.0
        %330 = vmatpush1.msra.mxu0 0.0
        %331 = vmatprep.subr.mxu0 0.0
        %332 = vmatpush1.msra.mxu0 0.0
        %333 = vmatprep.subr.mxu0 0.0
        %334 = vmatpush1.msra.mxu0 0.0
        %335 = vmatprep.subr.mxu0 0.0
        %336 = vmatpush1.msra.mxu0 0.0
        %337 = vmatprep.subr.mxu0 0.0
        %338 = vmatpush1.msra.mxu0 0.0
        %339 = vmatprep.subr.mxu0 0.0
        %340 = vmatpush1.msra.mxu0 0.0
        %341 = vmatprep.subr.mxu0 0.0
        %342 = vmatpush1.msra.mxu0 0.0
        %343 = vmatprep.subr.mxu0 0.0
        %344 = vmatpush1.msra.mxu0 0.0
        %345 = vmatprep.subr.mxu0 0.0
        %346 = vmatpush1.msra.mxu0 0.0
        %347 = vmatprep.subr.mxu0 0.0
        %348 = vmatpush1.msra.mxu0 0.0
        %349 = vmatprep.subr.mxu0 0.0
        %350 = vmatpush1.msra.mxu0 0.0
        %351 = vmatprep.subr.mxu0 0.0
        %352 = vmatpush1.msra.mxu0 0.0
        %353 = vmatprep.subr.mxu0 0.0
        %354 = vmatpush1.msra.mxu0 0.0
        %355 = vmatprep.subr.mxu0 0.0
        %356 = vmatpush1.msra.mxu0 0.0
        %357 = vmatprep.subr.mxu0 0.0
        %358 = vmatpush1.msra.mxu0 0.0
        %359 = vmatprep.mubr.f32.mxu0 0.0
        %360 = vmatmul.mubr.f32.gmra.mrb[0].mxu0 %v293
        %v361 = vpop.f32.mrb[0].mxu0
        %v362 = vadd.f32 0.0, %v361
        %v363 = vpop.f32.mrb[0].mxu0
        %v364 = vadd.f32 0.0, %v363
        %365 = vdwg.mxu0
        %v368 = vcombine.low %v362, %v364
        %v370 = vadd.f32 %v290, %v368
        %371 = vst [vmem:[#allocation2] sm:$0xff] %v370
        // Predicated region
        $region41: #{tpu_custom_call.1} parent=27 // pred_check
          %p372 = pneg %p217
        $region42: #{tpu_custom_call.1} parent=27 // pred_check_branch
          %374 = sbr.rel (%p372) target = $region44
        $region43: #{tpu_custom_call.1} parent=27 // pred_region
          %v375 = vld [vmem:[#allocation2] sm:$0xff]
          %v376 = vmax.f32 %v375, 0.0
          %v377 = vld [vmem:[%s191] sm:$0xff]
          %v379 = vcombine.high %v377, %v377
          %vm381 = vcmask 1043456
          %v382 = vsel %vm381, %v377, 0.0
          %v383 = vsel %vm381, %v379, 0.0
          %v384 = vadd.f32 %v382, %v383
          %385 = vadd.xlane.f32.xlu0 %v384
          %v386 = vpop.xlane.xlu0 %385
          %v387 = vsel %vm381, %v386, -inf
          %v388 = vrot.slane %v387, 4
          %v389 = vmax.f32 %v387, %v388
          %v390 = vrot.slane %v389, 2
          %v391 = vmax.f32 %v389, %v390
          %v392 = vrot.slane %v391, 1
          %v393 = vmax.f32 %v391, %v392
          %v394 = vsub.f32 %v386, %v393
          %v395 = vmul.f32 %v394, 1.442695
          %v396 = vpow.pop %v395
          %v397 = vsel %vm381, %v396, 0.0
          %v398 = vrot.slane %v397, 4
          %v399 = vadd.f32 %v397, %v398
          %v400 = vrot.slane %v399, 2
          %v401 = vadd.f32 %v399, %v400
          %v402 = vrot.slane %v401, 1
          %v403 = vadd.f32 %v401, %v402
          %v404 = vrcp.pop %v403
          %v405 = vmul.f32 %v396, %v404
          %v406 = vmul.f32 %v376, %v376
          %v408 = vcombine.high %v406, %v406
          %v410 = vsel %vm381, %v406, 0.0
          %v411 = vsel %vm381, %v408, 0.0
          %v412 = vadd.f32 %v410, %v411
          %413 = vadd.xlane.f32.xlu0 %v412
          %v414 = vpop.xlane.xlu0 %413
          %v415 = vmul.f32 %v377, %v377
          %v417 = vcombine.high %v415, %v415
          %v419 = vsel %vm381, %v415, 0.0
          %v420 = vsel %vm381, %v417, 0.0
          %v421 = vadd.f32 %v419, %v420
          %422 = vadd.xlane.f32.xlu0 %v421
          %v423 = vpop.xlane.xlu0 %422
          %v424 = vmul.f32 %v376, %v377
          %v426 = vcombine.high %v424, %v424
          %v428 = vsel %vm381, %v424, 0.0
          %v429 = vsel %vm381, %v426, 0.0
          %v430 = vadd.f32 %v428, %v429
          %431 = vadd.xlane.f32.xlu0 %v430
          %v432 = vpop.xlane.xlu0 %431
          %v433 = vmax.f32 %v414, 1e-24
          %v434 = vrsqrt.pop %v433
          %v435 = vmul.f32 %v432, %v434
          %v436 = vmax.f32 %v423, 1e-24
          %v437 = vrsqrt.pop %v436
          %v438 = vmul.f32 %v435, %v437
          %v439 = vmul.f32 %v438, %v405
          %vm440 = vcmask 3072
          %v441 = vsel %vm440, %v439, 0.0
          %442 = vadd.xlane.f32.xlu0 %v441
          %v443 = vpop.xlane.xlu0 %442
          %v444 = vrot.slane %v443, 4
          %v445 = vadd.f32 %v443, %v444
          %v446 = vrot.slane %v445, 2
          %v447 = vadd.f32 %v445, %v446
          %v448 = vrot.slane %v447, 1
          %v449 = vadd.f32 %v447, %v448
          %s450 = vtos %v449
          %v452 = vcombine.high %v376, %v376
          %v454 = vsel %vm381, %v376, 0.0
          %v455 = vsel %vm381, %v452, 0.0
          %v456 = vadd.f32 %v454, %v455
          %457 = vadd.xlane.f32.xlu0 %v456
          %v458 = vpop.xlane.xlu0 %457
          %v459 = vmul.f32 %v458, %v458
          %v460 = vsel %vm440, %v459, 0.0
          %461 = vadd.xlane.f32.xlu0 %v460
          %v462 = vpop.xlane.xlu0 %461
          %v463 = vrot.slane %v462, 4
          %v464 = vadd.f32 %v462, %v463
          %v465 = vrot.slane %v464, 2
          %v466 = vadd.f32 %v464, %v465
          %v467 = vrot.slane %v466, 1
          %v468 = vadd.f32 %v466, %v467
          %s469 = vtos %v468
          %v470 = vstv %s469
          %v471 = vmul.f32 %v386, %v386
          %v472 = vsel %vm440, %v471, 0.0
          %473 = vadd.xlane.f32.xlu0 %v472
          %v474 = vpop.xlane.xlu0 %473
          %v475 = vrot.slane %v474, 4
          %v476 = vadd.f32 %v474, %v475
          %v477 = vrot.slane %v476, 2
          %v478 = vadd.f32 %v476, %v477
          %v479 = vrot.slane %v478, 1
          %v480 = vadd.f32 %v478, %v479
          %s481 = vtos %v480
          %v482 = vstv %s481
          %v483 = vmul.f32 %v458, %v386
          %v484 = vsel %vm440, %v483, 0.0
          %485 = vadd.xlane.f32.xlu0 %v484
          %v486 = vpop.xlane.xlu0 %485
          %v487 = vrot.slane %v486, 4
          %v488 = vadd.f32 %v486, %v487
          %v489 = vrot.slane %v488, 2
          %v490 = vadd.f32 %v488, %v489
          %v491 = vrot.slane %v490, 1
          %v492 = vadd.f32 %v490, %v491
          %s493 = vtos %v492
          %v494 = vstv %s493
          %v495 = vmax.f32 %v470, 1e-24
          %v496 = vrsqrt.pop %v495
          %v497 = vmul.f32 %v494, %v496
          %v498 = vmax.f32 %v482, 1e-24
          %v499 = vrsqrt.pop %v498
          %v500 = vmul.f32 %v497, %v499
          %v501 = vrot.slane %v454, 4
          %v502 = vadd.f32 %v454, %v501
          %v503 = vrot.slane %v502, 2
          %v504 = vadd.f32 %v502, %v503
          %v505 = vrot.slane %v504, 1
          %v506 = vadd.f32 %v504, %v505
          %v507 = vrot.slane %v455, 4
          %v508 = vadd.f32 %v455, %v507
          %v509 = vrot.slane %v508, 2
          %v510 = vadd.f32 %v508, %v509
          %v511 = vrot.slane %v510, 1
          %v512 = vadd.f32 %v510, %v511
          %v513 = vmul.f32 %v506, 0.25
          %v514 = vmul.f32 %v512, 0.25
          %v515 = vrot.slane %v382, 4
          %v516 = vadd.f32 %v382, %v515
          %v517 = vrot.slane %v516, 2
          %v518 = vadd.f32 %v516, %v517
          %v519 = vrot.slane %v518, 1
          %v520 = vadd.f32 %v518, %v519
          %v521 = vrot.slane %v383, 4
          %v522 = vadd.f32 %v383, %v521
          %v523 = vrot.slane %v522, 2
          %v524 = vadd.f32 %v522, %v523
          %v525 = vrot.slane %v524, 1
          %v526 = vadd.f32 %v524, %v525
          %v527 = vmul.f32 %v520, 0.25
          %v528 = vmul.f32 %v526, 0.25
          %v529 = vmul.f32 %v513, %v513
          %v530 = vmul.f32 %v514, %v514
          %v531 = vadd.f32 %v529, %v530
          %532 = vadd.xlane.f32.xlu0 %v531
          %v533 = vpop.xlane.xlu0 %532
          %v534 = vmul.f32 %v527, %v527
          %v535 = vmul.f32 %v528, %v528
          %v536 = vadd.f32 %v534, %v535
          %537 = vadd.xlane.f32.xlu0 %v536
          %v538 = vpop.xlane.xlu0 %537
          %v539 = vmul.f32 %v513, %v527
          %v540 = vmul.f32 %v514, %v528
          %v541 = vadd.f32 %v539, %v540
          %542 = vadd.xlane.f32.xlu0 %v541
          %v543 = vpop.xlane.xlu0 %542
          %v544 = vmax.f32 %v533, 1e-24
          %v545 = vrsqrt.pop %v544
          %v546 = vmul.f32 %v543, %v545
          %v547 = vmax.f32 %v538, 1e-24
          %v548 = vrsqrt.pop %v547
          %v549 = vmul.f32 %v546, %v548
          %vm550 = vcmp.eq.s32.totalorder %v223, 0
          %v551 = vsel %vm550, 1.0, 0.0
          %v552 = vstv %s450
          %v553 = vmul.f32 %v551, %v552
          %vm554 = vcmp.eq.s32.totalorder %v223, 1
          %v555 = vsel %vm554, 1.0, 0.0
          %v556 = vmul.f32 %v555, %v500
          %v557 = vadd.f32 %v553, %v556
          %vm558 = vcmp.eq.s32.totalorder %v223, 2
          %v559 = vsel %vm558, 1.0, 0.0
          %v560 = vmul.f32 %v559, %v549
          %v561 = vadd.f32 %v557, %v560
          %562 = vst [vmem:[%s215] sm:$0x1] %v561
        $region44: #{tpu_custom_call.1} parent=27 // pred_fallthru
          _
        %s563 = sand.u32 %s96, 1
        %s564 = scalar_lea.sflag [#allocation5], %s563
        %s565 = sand.u32 %s96, 1
        %s566 = scalar_lea.vmem [#allocation8], %s565
        // Predicated region
        $region45: #{tpu_custom_call.1} parent=27 // pred_check
          %p567 = pneg %p106
        $region46: #{tpu_custom_call.1} parent=27 // pred_check_branch
          %569 = sbr.rel (%p567) target = $region48
        $region47: #{tpu_custom_call.1} parent=27 // pred_region
          %s571 = ssub.s32 16, 16
          %572 = vsyncadd %s564, %s571
          %s573 = smul.addr %s26, 16
          %s574 = scalar_lea.hbm %s2, %s573
          %s576 = sshll.u32 %s566, 4
          %s577 = int_to_ptr.vmem [resolvable:$true] %s576
          %579 = dma.vmem_to_hbm [thread:$0]  %s577, 16, %s574, %s564
        $region48: #{tpu_custom_call.1} parent=27 // pred_fallthru
          _
      $region28: #{tpu_custom_call.1} parent=5 // pred_fallthru
        _
      %p580 = scmp.le.s32.totalorder 2, %s17
      // Predicated region
      $region49: #{tpu_custom_call.1} parent=5 // pred_check
        %p581 = pneg %p580
      $region50: #{tpu_custom_call.1} parent=5 // pred_check_branch
        %583 = sbr.rel (%p581) target = $region52
      $region51: #{tpu_custom_call.1} parent=5 // pred_region
        %s584 = ssub.s32 %s17, 2
        // Predicated region
        $region53: #{tpu_custom_call.1} parent=51 // pred_check
          %p585 = pneg %p112
        $region54: #{tpu_custom_call.1} parent=51 // pred_check_branch
          %587 = sbr.rel (%p585) target = $region56
        $region55: #{tpu_custom_call.1} parent=51 // pred_region
          %s588 = sand.u32 %s97, 1
          %s589 = scalar_lea.sflag [#allocation5], %s588
          %s590 = sand.u32 %s97, 1
          %s591 = scalar_lea.vmem [#allocation8], %s590
          %592 = dma.done %s589, 16
        $region56: #{tpu_custom_call.1} parent=51 // pred_fallthru
          _
      $region52: #{tpu_custom_call.1} parent=5 // pred_fallthru
        _
    $region6: #{tpu_custom_call.1} parent=1 // loop_footer
      %s21 = sadd.s32 1, %s17
    $region7: #{tpu_custom_call.1} parent=1 // loop_footer_branch
      %16 = sbr.rel target = $region3
    $region8: #{tpu_custom_call.1} parent=1 // loop_exit
      _
    %593 = vsyncpa [#allocation4], 1
    %s594 = scalar_lea.sflag [#allocation4], 1
    %595 = vsyncpa %s594, 1
    %596 = vsyncpa [#allocation7], 1
    %s597 = scalar_lea.sflag [#allocation7], 1
    %598 = vsyncpa %s597, 1
    %599 = vsyncpa [#allocation5], 1
    %s600 = scalar_lea.sflag [#allocation5], 1
    %601 = vsyncpa %s600, 1

</llo_original>
